<compile_context>
chip_gen: v5e
topology: v5e:2x2
jax: 0.10.0
libtpu: 0.0.40
codegen_flags: <defaults>
</compile_context>

<pallas_src>
import functools

import jax
import jax.numpy as jnp
import numpy as np
from jax import lax
from jax.experimental import pallas as pl
from jax.experimental.pallas import tpu as pltpu


def _round_up(x, m):
    return ((x + m - 1) // m) * m


def _mobile_block_kernel(
    x_ref,      # (nb, S*S*Hq, Wq, Cin)  bf16  space-to-depth padded input block
    wdw_ref,    # (9, 1, Cin)            f32   depthwise weights (BN scale folded)
    bdw_ref,    # (1, Cin)               f32   depthwise BN shift (incl. conv bias)
    wpw_ref,    # (Cin, 1, CP)           f32   pointwise weights, Cout padded to CP
    bpw_ref,    # (1, CP)                f32   pointwise BN shift, padded to CP
    o_ref,      # (nb, Ho, Wo, CP)       f32   lane-dense output block
    *, hq, stride,
):
    nb, ho, wo, cp = o_ref.shape
    cin = x_ref.shape[-1]

    # Upcast once right after the load: only the HBM->VMEM stream is bf16.
    x = x_ref[...].astype(jnp.float32)        # (nb, S*S*Hq, Wq, Cin)
    wdw = wdw_ref[...]                        # (9, 1, Cin)

    # ---- depthwise 3x3 conv: 9 contiguous-slice taps, f32 VPU mul-adds ----
    acc = jnp.zeros((nb, ho, wo, cin), jnp.float32)
    for kh in range(3):
        for kw in range(3):
            p = (kh % stride) * stride + (kw % stride)   # stride-phase index
            r0 = p * hq + kh // stride                   # row start inside block
            c0 = kw // stride
            patch = x[:, r0:r0 + ho, c0:c0 + wo, :]      # (nb, Ho, Wo, Cin)
            acc = acc + patch * wdw[kh * 3 + kw]         # leading-axis weight slice
    # BN scale already folded into wdw; only shift + ReLU remain.
    dw = jnp.maximum(acc + bdw_ref[...], 0.0)            # (nb, Ho, Wo, Cin)

    # ---- pointwise 1x1 conv as Cin f32 VPU FMAs (no MXU, no bf16 cast) ----
    # Output channel dim is already padded to CP (multiple of 128), so the
    # result tile is natively lane-dense: no reshape/relayout before the store.
    wpw = wpw_ref[...]                                   # (Cin, 1, CP)
    pw = dw[..., 0:1] * wpw[0]
    for ci in range(1, cin):
        pw = pw + dw[..., ci:ci + 1] * wpw[ci]
    pw = jnp.maximum(pw + bpw_ref[...], 0.0)             # (nb, Ho, Wo, CP)
    o_ref[...] = pw.astype(o_ref.dtype)


def _space_to_depth(x_pad, stride, ho, wo):
    """Split padded NHWC into stride x stride phases so every depthwise tap in
    the kernel is a contiguous static slice: (N,Hp,Wp,C) -> (N, S*S*Hq, Wq, C)."""
    n, hp, wp, c = x_pad.shape
    off = (3 - 1) // stride                    # max kernel offset after the split
    hq, wq = ho + off, wo + off
    pad_h = max(0, stride * hq - hp)
    pad_w = max(0, stride * wq - wp)
    if pad_h or pad_w:
        x_pad = jnp.pad(x_pad, ((0, 0), (0, pad_h), (0, pad_w), (0, 0)))
    phases = [x_pad[:, ph::stride, pw::stride, :][:, :hq, :wq, :]
              for ph in range(stride) for pw in range(stride)]
    x_ph = jnp.stack(phases, axis=1)           # (N, S*S, Hq, Wq, C)
    return x_ph.reshape(n, stride * stride * hq, wq, c), hq, wq


def _pick_batch_block(n, per_image_bytes, vmem_budget_bytes):
    """Largest divisor of n that keeps >=2 grid steps (pipelining and both v7x
    TensorCores get work) and fits the double-buffered per-step VMEM budget."""
    best = 1
    for d in range(1, n + 1):
        if n % d:
            continue
        if n >= 2 and n // d < 2:              # keep at least 2 grid steps
            continue
        if 2 * d * per_image_bytes > vmem_budget_bytes:   # double-buffered blocks
            continue
        best = d
    return best


def mobilev1_block_pallas(x_nchw, params, *, stride, batch_block=None,
                          vmem_budget_bytes=8 * 1024 * 1024):
    """x_nchw: (N, Cin, H, W) float32. Returns (N, Cout, Ho, Wo) float32."""
    n, cin, h, w = x_nchw.shape
    cout = params["cout"]
    cp = params["w_pw"].shape[-1]              # Cout padded to a multiple of 128
    ho = (h + 2 - 3) // stride + 1
    wo = (w + 2 - 3) // stride + 1

    # Wrapper-side layout prep (plain XLA).  Cast to bf16 FIRST so every
    # subsequent pass and the kernel input DMA move half the bytes; XLA fuses
    # the transpose+cast+pad+slice+stack chain into one or two HBM passes.
    # NOTE: the next step would be folding the phase split into the kernel via
    # sublane-strided ref reads to drop this wrapper pass entirely.
    x_nhwc = jnp.transpose(x_nchw, (0, 2, 3, 1)).astype(jnp.bfloat16)
    x_pad = jnp.pad(x_nhwc, ((0, 0), (1, 1), (1, 1), (0, 0)))
    x_ph, hq, wq = _space_to_depth(x_pad, stride, ho, wo)   # (N, S*S*Hq, Wq, Cin)

    ss = stride * stride
    per_image_bytes = ss * hq * wq * cin * 2 + ho * wo * cp * 4
    if batch_block is None:
        batch_block = _pick_batch_block(n, per_image_bytes, vmem_budget_bytes)
    nb = batch_block
    assert n % nb == 0, "batch_block must divide the batch size"
    num_blocks = n // nb

    kernel = functools.partial(_mobile_block_kernel, hq=hq, stride=stride)

    flops = 2 * n * ho * wo * cin * 9 + 2 * n * ho * wo * cin * cout
    bytes_accessed = (x_ph.size * x_ph.dtype.itemsize
                      + n * ho * wo * cp * 4
                      + (9 * cin + cin + cin * cp + cp) * 4)

    out = pl.pallas_call(
        kernel,
        out_shape=jax.ShapeDtypeStruct((n, ho, wo, cp), jnp.float32),
        grid_spec=pltpu.PrefetchScalarGridSpec(
            num_scalar_prefetch=0,
            grid=(num_blocks,),
            in_specs=[
                pl.BlockSpec((nb, ss * hq, wq, cin), lambda i: (i, 0, 0, 0)),
                pl.BlockSpec((9, 1, cin), lambda i: (0, 0, 0)),
                pl.BlockSpec((1, cin), lambda i: (0, 0)),
                pl.BlockSpec((cin, 1, cp), lambda i: (0, 0, 0)),
                pl.BlockSpec((1, cp), lambda i: (0, 0)),
            ],
            out_specs=pl.BlockSpec((nb, ho, wo, cp), lambda i: (i, 0, 0, 0)),
        ),
        compiler_params=pltpu.CompilerParams(
            dimension_semantics=("parallel",),
            vmem_limit_bytes=32 * 1024 * 1024),
        cost_estimate=pl.CostEstimate(flops=flops, transcendentals=0,
                                      bytes_accessed=bytes_accessed),
    )(x_ph, params["w_dw"], params["shift_dw"], params["w_pw"], params["shift_pw"])

    # (N, Ho, Wo, CP) -> drop lane padding -> NCHW (single small output pass).
    return jnp.transpose(out[..., :cout], (0, 3, 1, 2))


def make_params(key, cin, cout, eps=1e-5):
    """Deterministic synthetic parameters with the same shapes as the module."""
    ks = jax.random.split(key, 12)
    # dwConv1: Conv2d(cin, cin, 3, groups=cin) weight (cin,1,3,3), bias (cin,)
    w_dw_oihw = jax.random.normal(ks[0], (cin, 1, 3, 3), jnp.float32) * 0.2
    b_dw = jax.random.normal(ks[1], (cin,), jnp.float32) * 0.1
    g1 = 1.0 + 0.1 * jax.random.normal(ks[2], (cin,), jnp.float32)
    be1 = 0.1 * jax.random.normal(ks[3], (cin,), jnp.float32)
    m1 = 0.1 * jax.random.normal(ks[4], (cin,), jnp.float32)
    v1 = jnp.abs(jax.random.normal(ks[5], (cin,), jnp.float32)) + 0.5
    # stdConv2: Conv2d(cin, cout, 1) weight (cout,cin,1,1), bias (cout,)
    w_pw_oihw = jax.random.normal(ks[6], (cout, cin, 1, 1), jnp.float32) * 0.2
    b_pw = jax.random.normal(ks[7], (cout,), jnp.float32) * 0.1
    g2 = 1.0 + 0.1 * jax.random.normal(ks[8], (cout,), jnp.float32)
    be2 = 0.1 * jax.random.normal(ks[9], (cout,), jnp.float32)
    m2 = 0.1 * jax.random.normal(ks[10], (cout,), jnp.float32)
    v2 = jnp.abs(jax.random.normal(ks[11], (cout,), jnp.float32)) + 0.5

    # Fold BN (eval mode) + conv bias into per-channel scale/shift, then fold
    # the scales straight into the conv weights (wrapper-side constant fold).
    s1 = g1 / jnp.sqrt(v1 + eps)
    sh1 = be1 + (b_dw - m1) * s1
    s2 = g2 / jnp.sqrt(v2 + eps)
    sh2 = be2 + (b_pw - m2) * s2

    cp = _round_up(cout, 128)

    w_dw_hwc = jnp.transpose(w_dw_oihw[:, 0], (1, 2, 0)) * s1            # (3,3,Cin)
    w_pw_ck = jnp.transpose(w_pw_oihw[:, :, 0, 0], (1, 0)) * s2[None, :] # (Cin,Cout)
    w_pw_pad = jnp.zeros((cin, cp), jnp.float32).at[:, :cout].set(w_pw_ck)
    sh2_pad = jnp.zeros((cp,), jnp.float32).at[:cout].set(sh2)

    return {
        "w_dw": w_dw_hwc.reshape(9, 1, cin).astype(jnp.float32),     # scale folded
        "shift_dw": sh1.reshape(1, cin).astype(jnp.float32),
        "w_pw": w_pw_pad.reshape(cin, 1, cp).astype(jnp.float32),    # scale folded, padded
        "shift_pw": sh2_pad.reshape(1, cp).astype(jnp.float32),
        "cout": cout,
        # raw PyTorch-shaped tensors kept for the reference check
        "_raw": (w_dw_oihw, b_dw, g1, be1, m1, v1, w_pw_oihw, b_pw, g2, be2, m2, v2),
        "_eps": eps,
    }


def reference_forward(x_nchw, params, *, stride):
    """Pure-JAX NCHW f32 reference mirroring the PyTorch module (BN eval mode)."""
    (w_dw, b_dw, g1, be1, m1, v1, w_pw, b_pw, g2, be2, m2, v2) = params["_raw"]
    eps = params["_eps"]
    cin = x_nchw.shape[1]

    y = lax.conv_general_dilated(
        x_nchw, w_dw, window_strides=(stride, stride), padding=((1, 1), (1, 1)),
        dimension_numbers=("NCHW", "OIHW", "NCHW"), feature_group_count=cin)
    y = y + b_dw[None, :, None, None]
    y = (y - m1[None, :, None, None]) / jnp.sqrt(v1 + eps)[None, :, None, None]
    y = y * g1[None, :, None, None] + be1[None, :, None, None]
    y = jnp.maximum(y, 0.0)

    z = lax.conv_general_dilated(
        y, w_pw, window_strides=(1, 1), padding="VALID",
        dimension_numbers=("NCHW", "OIHW", "NCHW"))
    z = z + b_pw[None, :, None, None]
    z = (z - m2[None, :, None, None]) / jnp.sqrt(v2 + eps)[None, :, None, None]
    z = z * g2[None, :, None, None] + be2[None, :, None, None]
    return jnp.maximum(z, 0.0)


if __name__ == "__main__":
    key = jax.random.PRNGKey(0)
    # Case 1: Mobilev1Block(4, 8, first=False)  -> downSample=True  -> stride 2.
    # Case 2: Mobilev1Block(8, 8)               -> downSample=False -> stride 1.
    cases = [
        dict(n=2, cin=4, cout=8, h=16, w=16, stride=2),
        dict(n=2, cin=8, cout=8, h=16, w=16, stride=1),
    ]
    for cfg in cases:
        kx, kp, key = jax.random.split(key, 3)
        x = jax.random.normal(kx, (cfg["n"], cfg["cin"], cfg["h"], cfg["w"]),
                              jnp.float32)
        params = make_params(kp, cfg["cin"], cfg["cout"])

        out = jax.block_until_ready(
            mobilev1_block_pallas(x, params, stride=cfg["stride"]))
        ref = jax.block_until_ready(
            reference_forward(x, params, stride=cfg["stride"]))
        # Only the bf16 quantization of the activation stream separates the two
        # paths (all kernel math is f32), so 1e-2 is a comfortable bound while
        # still catching layout/indexing bugs (those produce O(0.5) errors).
        np.testing.assert_allclose(np.asarray(out), np.asarray(ref),
                                   rtol=1e-2, atol=1e-2)

    print("KERNEL_OK")
</pallas_src>

<mosaic_0001>
module attributes {stable_mosaic.version = 11 : i64} {
  func.func @_mobile_block_kernel(%arg0: i32, %arg1: memref<1x36x9x4xbf16, #tpu.memory_space<vmem>>, %arg2: memref<9x1x4xf32, #tpu.memory_space<vmem>>, %arg3: memref<1x4xf32, #tpu.memory_space<vmem>>, %arg4: memref<4x1x128xf32, #tpu.memory_space<vmem>>, %arg5: memref<1x128xf32, #tpu.memory_space<vmem>>, %arg6: memref<1x8x8x128xf32, #tpu.memory_space<vmem>>) attributes {dimension_semantics = [#tpu.dimension_semantics<parallel>], iteration_bounds = array<i64: 2>, scalar_prefetch = 0 : i64, scratch_operands = 0 : i64, tpu.core_type = #tpu.core_type<tc>, window_params = [{transform_indices = @transform_0, window_bounds = array<i64: 1, 36, 9, 4>}, {pipeline_mode = #tpu.pipeline_mode<synchronous>, transform_indices = @transform_1, window_bounds = array<i64: 9, 1, 4>}, {pipeline_mode = #tpu.pipeline_mode<synchronous>, transform_indices = @transform_2, window_bounds = array<i64: 1, 4>}, {pipeline_mode = #tpu.pipeline_mode<synchronous>, transform_indices = @transform_3, window_bounds = array<i64: 4, 1, 128>}, {pipeline_mode = #tpu.pipeline_mode<synchronous>, transform_indices = @transform_4, window_bounds = array<i64: 1, 128>}, {transform_indices = @transform_5, window_bounds = array<i64: 1, 8, 8, 128>}]} {
    %c0 = arith.constant 0 : index
    %c0_0 = arith.constant 0 : index
    %c0_1 = arith.constant 0 : index
    %c0_2 = arith.constant 0 : index
    %0 = vector.load %arg1[%c0, %c0_0, %c0_1, %c0_2] : memref<1x36x9x4xbf16, #tpu.memory_space<vmem>>, vector<1x36x9x4xbf16>
    %1 = arith.extf %0 : vector<1x36x9x4xbf16> to vector<1x36x9x4xf32>
    %c0_3 = arith.constant 0 : index
    %c0_4 = arith.constant 0 : index
    %c0_5 = arith.constant 0 : index
    %2 = vector.load %arg2[%c0_3, %c0_4, %c0_5] : memref<9x1x4xf32, #tpu.memory_space<vmem>>, vector<9x1x4xf32>
    %cst = arith.constant 0.000000e+00 : f32
    %3 = vector.broadcast %cst : f32 to vector<1x8x8x4xf32>
    %4 = vector.extract_strided_slice %1 {offsets = [0, 0, 0, 0], sizes = [1, 8, 8, 4], strides = [1, 1, 1, 1]} : vector<1x36x9x4xf32> to vector<1x8x8x4xf32>
    %5 = vector.extract_strided_slice %2 {offsets = [0, 0, 0], sizes = [1, 1, 4], strides = [1, 1, 1]} : vector<9x1x4xf32> to vector<1x1x4xf32>
    %6 = vector.shape_cast %5 : vector<1x1x4xf32> to vector<1x4xf32>
    %7 = vector.shape_cast %6 : vector<1x4xf32> to vector<1x1x1x4xf32>
    %8 = vector.broadcast %7 : vector<1x1x1x4xf32> to vector<1x8x8x4xf32>
    %9 = arith.mulf %4, %8 : vector<1x8x8x4xf32>
    %10 = arith.addf %3, %9 : vector<1x8x8x4xf32>
    %11 = vector.extract_strided_slice %1 {offsets = [0, 9, 0, 0], sizes = [1, 8, 8, 4], strides = [1, 1, 1, 1]} : vector<1x36x9x4xf32> to vector<1x8x8x4xf32>
    %12 = vector.extract_strided_slice %2 {offsets = [1, 0, 0], sizes = [1, 1, 4], strides = [1, 1, 1]} : vector<9x1x4xf32> to vector<1x1x4xf32>
    %13 = vector.shape_cast %12 : vector<1x1x4xf32> to vector<1x4xf32>
    %14 = vector.shape_cast %13 : vector<1x4xf32> to vector<1x1x1x4xf32>
    %15 = vector.broadcast %14 : vector<1x1x1x4xf32> to vector<1x8x8x4xf32>
    %16 = arith.mulf %11, %15 : vector<1x8x8x4xf32>
    %17 = arith.addf %10, %16 : vector<1x8x8x4xf32>
    %18 = vector.extract_strided_slice %1 {offsets = [0, 0, 1, 0], sizes = [1, 8, 8, 4], strides = [1, 1, 1, 1]} : vector<1x36x9x4xf32> to vector<1x8x8x4xf32>
    %19 = vector.extract_strided_slice %2 {offsets = [2, 0, 0], sizes = [1, 1, 4], strides = [1, 1, 1]} : vector<9x1x4xf32> to vector<1x1x4xf32>
    %20 = vector.shape_cast %19 : vector<1x1x4xf32> to vector<1x4xf32>
    %21 = vector.shape_cast %20 : vector<1x4xf32> to vector<1x1x1x4xf32>
    %22 = vector.broadcast %21 : vector<1x1x1x4xf32> to vector<1x8x8x4xf32>
    %23 = arith.mulf %18, %22 : vector<1x8x8x4xf32>
    %24 = arith.addf %17, %23 : vector<1x8x8x4xf32>
    %25 = vector.extract_strided_slice %1 {offsets = [0, 18, 0, 0], sizes = [1, 8, 8, 4], strides = [1, 1, 1, 1]} : vector<1x36x9x4xf32> to vector<1x8x8x4xf32>
    %26 = vector.extract_strided_slice %2 {offsets = [3, 0, 0], sizes = [1, 1, 4], strides = [1, 1, 1]} : vector<9x1x4xf32> to vector<1x1x4xf32>
    %27 = vector.shape_cast %26 : vector<1x1x4xf32> to vector<1x4xf32>
    %28 = vector.shape_cast %27 : vector<1x4xf32> to vector<1x1x1x4xf32>
    %29 = vector.broadcast %28 : vector<1x1x1x4xf32> to vector<1x8x8x4xf32>
    %30 = arith.mulf %25, %29 : vector<1x8x8x4xf32>
    %31 = arith.addf %24, %30 : vector<1x8x8x4xf32>
    %32 = vector.extract_strided_slice %1 {offsets = [0, 27, 0, 0], sizes = [1, 8, 8, 4], strides = [1, 1, 1, 1]} : vector<1x36x9x4xf32> to vector<1x8x8x4xf32>
    %33 = vector.extract_strided_slice %2 {offsets = [4, 0, 0], sizes = [1, 1, 4], strides = [1, 1, 1]} : vector<9x1x4xf32> to vector<1x1x4xf32>
    %34 = vector.shape_cast %33 : vector<1x1x4xf32> to vector<1x4xf32>
    %35 = vector.shape_cast %34 : vector<1x4xf32> to vector<1x1x1x4xf32>
    %36 = vector.broadcast %35 : vector<1x1x1x4xf32> to vector<1x8x8x4xf32>
    %37 = arith.mulf %32, %36 : vector<1x8x8x4xf32>
    %38 = arith.addf %31, %37 : vector<1x8x8x4xf32>
    %39 = vector.extract_strided_slice %1 {offsets = [0, 18, 1, 0], sizes = [1, 8, 8, 4], strides = [1, 1, 1, 1]} : vector<1x36x9x4xf32> to vector<1x8x8x4xf32>
    %40 = vector.extract_strided_slice %2 {offsets = [5, 0, 0], sizes = [1, 1, 4], strides = [1, 1, 1]} : vector<9x1x4xf32> to vector<1x1x4xf32>
    %41 = vector.shape_cast %40 : vector<1x1x4xf32> to vector<1x4xf32>
    %42 = vector.shape_cast %41 : vector<1x4xf32> to vector<1x1x1x4xf32>
    %43 = vector.broadcast %42 : vector<1x1x1x4xf32> to vector<1x8x8x4xf32>
    %44 = arith.mulf %39, %43 : vector<1x8x8x4xf32>
    %45 = arith.addf %38, %44 : vector<1x8x8x4xf32>
    %46 = vector.extract_strided_slice %1 {offsets = [0, 1, 0, 0], sizes = [1, 8, 8, 4], strides = [1, 1, 1, 1]} : vector<1x36x9x4xf32> to vector<1x8x8x4xf32>
    %47 = vector.extract_strided_slice %2 {offsets = [6, 0, 0], sizes = [1, 1, 4], strides = [1, 1, 1]} : vector<9x1x4xf32> to vector<1x1x4xf32>
    %48 = vector.shape_cast %47 : vector<1x1x4xf32> to vector<1x4xf32>
    %49 = vector.shape_cast %48 : vector<1x4xf32> to vector<1x1x1x4xf32>
    %50 = vector.broadcast %49 : vector<1x1x1x4xf32> to vector<1x8x8x4xf32>
    %51 = arith.mulf %46, %50 : vector<1x8x8x4xf32>
    %52 = arith.addf %45, %51 : vector<1x8x8x4xf32>
    %53 = vector.extract_strided_slice %1 {offsets = [0, 10, 0, 0], sizes = [1, 8, 8, 4], strides = [1, 1, 1, 1]} : vector<1x36x9x4xf32> to vector<1x8x8x4xf32>
    %54 = vector.extract_strided_slice %2 {offsets = [7, 0, 0], sizes = [1, 1, 4], strides = [1, 1, 1]} : vector<9x1x4xf32> to vector<1x1x4xf32>
    %55 = vector.shape_cast %54 : vector<1x1x4xf32> to vector<1x4xf32>
    %56 = vector.shape_cast %55 : vector<1x4xf32> to vector<1x1x1x4xf32>
    %57 = vector.broadcast %56 : vector<1x1x1x4xf32> to vector<1x8x8x4xf32>
    %58 = arith.mulf %53, %57 : vector<1x8x8x4xf32>
    %59 = arith.addf %52, %58 : vector<1x8x8x4xf32>
    %60 = vector.extract_strided_slice %1 {offsets = [0, 1, 1, 0], sizes = [1, 8, 8, 4], strides = [1, 1, 1, 1]} : vector<1x36x9x4xf32> to vector<1x8x8x4xf32>
    %61 = vector.extract_strided_slice %2 {offsets = [8, 0, 0], sizes = [1, 1, 4], strides = [1, 1, 1]} : vector<9x1x4xf32> to vector<1x1x4xf32>
    %62 = vector.shape_cast %61 : vector<1x1x4xf32> to vector<1x4xf32>
    %63 = vector.shape_cast %62 : vector<1x4xf32> to vector<1x1x1x4xf32>
    %64 = vector.broadcast %63 : vector<1x1x1x4xf32> to vector<1x8x8x4xf32>
    %65 = arith.mulf %60, %64 : vector<1x8x8x4xf32>
    %66 = arith.addf %59, %65 : vector<1x8x8x4xf32>
    %c0_6 = arith.constant 0 : index
    %c0_7 = arith.constant 0 : index
    %67 = vector.load %arg3[%c0_6, %c0_7] : memref<1x4xf32, #tpu.memory_space<vmem>>, vector<1x4xf32>
    %68 = vector.shape_cast %67 : vector<1x4xf32> to vector<1x1x1x4xf32>
    %69 = vector.broadcast %68 : vector<1x1x1x4xf32> to vector<1x8x8x4xf32>
    %70 = arith.addf %66, %69 : vector<1x8x8x4xf32>
    %cst_8 = arith.constant 0.000000e+00 : f32
    %71 = vector.broadcast %cst_8 : f32 to vector<1x8x8x4xf32>
    %72 = arith.maximumf %70, %71 : vector<1x8x8x4xf32>
    %c0_9 = arith.constant 0 : index
    %c0_10 = arith.constant 0 : index
    %c0_11 = arith.constant 0 : index
    %73 = vector.load %arg4[%c0_9, %c0_10, %c0_11] : memref<4x1x128xf32, #tpu.memory_space<vmem>>, vector<4x1x128xf32>
    %74 = vector.extract_strided_slice %72 {offsets = [0, 0, 0, 0], sizes = [1, 8, 8, 1], strides = [1, 1, 1, 1]} : vector<1x8x8x4xf32> to vector<1x8x8x1xf32>
    %75 = vector.extract_strided_slice %73 {offsets = [0, 0, 0], sizes = [1, 1, 128], strides = [1, 1, 1]} : vector<4x1x128xf32> to vector<1x1x128xf32>
    %76 = vector.shape_cast %75 : vector<1x1x128xf32> to vector<1x128xf32>
    %77 = vector.shape_cast %76 : vector<1x128xf32> to vector<1x1x1x128xf32>
    %78 = vector.broadcast %74 : vector<1x8x8x1xf32> to vector<1x8x8x128xf32>
    %79 = vector.broadcast %77 : vector<1x1x1x128xf32> to vector<1x8x8x128xf32>
    %80 = arith.mulf %78, %79 : vector<1x8x8x128xf32>
    %81 = vector.extract_strided_slice %72 {offsets = [0, 0, 0, 1], sizes = [1, 8, 8, 1], strides = [1, 1, 1, 1]} : vector<1x8x8x4xf32> to vector<1x8x8x1xf32>
    %82 = vector.extract_strided_slice %73 {offsets = [1, 0, 0], sizes = [1, 1, 128], strides = [1, 1, 1]} : vector<4x1x128xf32> to vector<1x1x128xf32>
    %83 = vector.shape_cast %82 : vector<1x1x128xf32> to vector<1x128xf32>
    %84 = vector.shape_cast %83 : vector<1x128xf32> to vector<1x1x1x128xf32>
    %85 = vector.broadcast %81 : vector<1x8x8x1xf32> to vector<1x8x8x128xf32>
    %86 = vector.broadcast %84 : vector<1x1x1x128xf32> to vector<1x8x8x128xf32>
    %87 = arith.mulf %85, %86 : vector<1x8x8x128xf32>
    %88 = arith.addf %80, %87 : vector<1x8x8x128xf32>
    %89 = vector.extract_strided_slice %72 {offsets = [0, 0, 0, 2], sizes = [1, 8, 8, 1], strides = [1, 1, 1, 1]} : vector<1x8x8x4xf32> to vector<1x8x8x1xf32>
    %90 = vector.extract_strided_slice %73 {offsets = [2, 0, 0], sizes = [1, 1, 128], strides = [1, 1, 1]} : vector<4x1x128xf32> to vector<1x1x128xf32>
    %91 = vector.shape_cast %90 : vector<1x1x128xf32> to vector<1x128xf32>
    %92 = vector.shape_cast %91 : vector<1x128xf32> to vector<1x1x1x128xf32>
    %93 = vector.broadcast %89 : vector<1x8x8x1xf32> to vector<1x8x8x128xf32>
    %94 = vector.broadcast %92 : vector<1x1x1x128xf32> to vector<1x8x8x128xf32>
    %95 = arith.mulf %93, %94 : vector<1x8x8x128xf32>
    %96 = arith.addf %88, %95 : vector<1x8x8x128xf32>
    %97 = vector.extract_strided_slice %72 {offsets = [0, 0, 0, 3], sizes = [1, 8, 8, 1], strides = [1, 1, 1, 1]} : vector<1x8x8x4xf32> to vector<1x8x8x1xf32>
    %98 = vector.extract_strided_slice %73 {offsets = [3, 0, 0], sizes = [1, 1, 128], strides = [1, 1, 1]} : vector<4x1x128xf32> to vector<1x1x128xf32>
    %99 = vector.shape_cast %98 : vector<1x1x128xf32> to vector<1x128xf32>
    %100 = vector.shape_cast %99 : vector<1x128xf32> to vector<1x1x1x128xf32>
    %101 = vector.broadcast %97 : vector<1x8x8x1xf32> to vector<1x8x8x128xf32>
    %102 = vector.broadcast %100 : vector<1x1x1x128xf32> to vector<1x8x8x128xf32>
    %103 = arith.mulf %101, %102 : vector<1x8x8x128xf32>
    %104 = arith.addf %96, %103 : vector<1x8x8x128xf32>
    %c0_12 = arith.constant 0 : index
    %c0_13 = arith.constant 0 : index
    %105 = vector.load %arg5[%c0_12, %c0_13] : memref<1x128xf32, #tpu.memory_space<vmem>>, vector<1x128xf32>
    %106 = vector.shape_cast %105 : vector<1x128xf32> to vector<1x1x1x128xf32>
    %107 = vector.broadcast %106 : vector<1x1x1x128xf32> to vector<1x8x8x128xf32>
    %108 = arith.addf %104, %107 : vector<1x8x8x128xf32>
    %cst_14 = arith.constant 0.000000e+00 : f32
    %109 = vector.broadcast %cst_14 : f32 to vector<1x8x8x128xf32>
    %110 = arith.maximumf %108, %109 : vector<1x8x8x128xf32>
    %c0_15 = arith.constant 0 : index
    %c0_16 = arith.constant 0 : index
    %c0_17 = arith.constant 0 : index
    %c0_18 = arith.constant 0 : index
    %111 = vector.load %arg6[%c0_15, %c0_16, %c0_17, %c0_18] : memref<1x8x8x128xf32, #tpu.memory_space<vmem>>, vector<1x8x8x128xf32>
    tpu.vector_store %arg6[%c0_15, %c0_16, %c0_17, %c0_18], %110 {strides = array<i32>} : memref<1x8x8x128xf32, #tpu.memory_space<vmem>>, vector<1x8x8x128xf32>,
    return
  }
  func.func @transform_0(%arg0: i32) -> (i32, i32, i32, i32) {
    %c0_i32 = arith.constant 0 : i32
    %c0_i32_0 = arith.constant 0 : i32
    %c0_i32_1 = arith.constant 0 : i32
    %c0_i32_2 = arith.constant 0 : i32
    return %arg0, %c0_i32, %c0_i32_0, %c0_i32_1 : i32, i32, i32, i32
  }
  func.func @transform_1(%arg0: i32) -> (i32, i32, i32) {
    %c0_i32 = arith.constant 0 : i32
    %c0_i32_0 = arith.constant 0 : i32
    %c0_i32_1 = arith.constant 0 : i32
    %c0_i32_2 = arith.constant 0 : i32
    return %c0_i32, %c0_i32_0, %c0_i32_1 : i32, i32, i32
  }
  func.func @transform_2(%arg0: i32) -> (i32, i32) {
    %c0_i32 = arith.constant 0 : i32
    %c0_i32_0 = arith.constant 0 : i32
    %c0_i32_1 = arith.constant 0 : i32
    return %c0_i32, %c0_i32_0 : i32, i32
  }
  func.func @transform_3(%arg0: i32) -> (i32, i32, i32) {
    %c0_i32 = arith.constant 0 : i32
    %c0_i32_0 = arith.constant 0 : i32
    %c0_i32_1 = arith.constant 0 : i32
    %c0_i32_2 = arith.constant 0 : i32
    return %c0_i32, %c0_i32_0, %c0_i32_1 : i32, i32, i32
  }
  func.func @transform_4(%arg0: i32) -> (i32, i32) {
    %c0_i32 = arith.constant 0 : i32
    %c0_i32_0 = arith.constant 0 : i32
    %c0_i32_1 = arith.constant 0 : i32
    return %c0_i32, %c0_i32_0 : i32, i32
  }
  func.func @transform_5(%arg0: i32) -> (i32, i32, i32, i32) {
    %c0_i32 = arith.constant 0 : i32
    %c0_i32_0 = arith.constant 0 : i32
    %c0_i32_1 = arith.constant 0 : i32
    %c0_i32_2 = arith.constant 0 : i32
    return %arg0, %c0_i32, %c0_i32_0, %c0_i32_1 : i32, i32, i32, i32
  }
}

</mosaic_0001>

<llo_original>
// kernel: tpu_custom_call.1
$region0: #{tpu_custom_call.1}
  #allocation0 [shape = 'u32[]', space=smem, size = 0x4, offset = 0x4, fixed_abs, tag = 'smem constant byte address 0x4 - core index']
  #allocation1 [shape = 'u32[72,128]{1,0:T(1,128)}', space=vmem, size = 0x9000, scoped, tag = 'internal scratch']
  %s0 = inlined_call_operand.vmem [shape: bf16[2,36,9,4], index: 0, kind: input, shape index: {}]
  %s1 = inlined_call_operand.vmem [shape: f32[9,1,4], index: 1, kind: input, shape index: {}]
  %s2 = inlined_call_operand.vmem [shape: f32[1,4], index: 2, kind: input, shape index: {}]
  %s3 = inlined_call_operand.vmem [shape: f32[4,1,128], index: 3, kind: input, shape index: {}]
  %s4 = inlined_call_operand.vmem [shape: f32[1,128], index: 4, kind: input, shape index: {}]
  %s5 = inlined_call_operand.hbm [shape: f32[2,8,8,128], index: 5, kind: output, shape index: {}]
  %s6 = sld [smem:[#allocation0]]
  $region53: #{tpu_custom_call.1} parent=0
    _
  %s8 = ssub.s32 1, %s6
  %s9 = scalar_select 0, %s8, %s6
  $region1: #{tpu_custom_call.1} parent=0
    #allocation2 [shape = 'u8[65536]{0}', space=vmem, size = 0x10000, scoped, tag = 'output window, operand 0']
    #allocation3 [shape = 's32[2]{0}', space=sflag, size = 0x8, scoped, tag = 'scoped memory for tpu_custom_call.1']
    %10 = vsyncpa [#allocation3], 0
    %s11 = scalar_lea.sflag [#allocation3], 1
    %12 = vsyncpa %s11, 0
    loop: start=0, step=1, limit=4
    $region2: #{tpu_custom_call.1} parent=1 // loop_pre_header
      _
    $region3: #{tpu_custom_call.1} parent=1 // loop_header
      %s14 = sphi 0, %s18
      %p15 = scmp.ge.s32.totalorder %s14, 4
      %s24 = sphi 0, %s26
      %s27 = sphi 0, %s24
      %s28 = sphi 0, %s27
      %s44 = sphi 0, %s28
      %s48 = sphi 0, %s48
      %s50 = sphi 0, %s48
      %s51 = sphi 0, %s50
      %s65 = sphi 0, %s51
      %s69 = sphi 0, %s69
      %s71 = sphi 0, %s69
      %s72 = sphi 0, %s71
      %s86 = sphi 0, %s72
      %s90 = sphi 0, %s90
      %s92 = sphi 0, %s90
      %s93 = sphi 0, %s92
      %s107 = sphi 0, %s93
      %s111 = sphi 0, %s111
      %s113 = sphi 0, %s111
      %s114 = sphi 0, %s113
      %s128 = sphi 0, %s114
      %s134 = sphi 0, %s136
      %s137 = sphi 0, %s134
      %s138 = sphi 0, %s137
      %s154 = sphi 0, %s138
    $region4: #{tpu_custom_call.1} parent=1 // loop_header_branch
      %17 = sbr.rel (%p15) target = $region8
    $region5: #{tpu_custom_call.1} parent=1 // loop_body
      %s19 = ssub.s32 %s14, 1
      %s20 = ssub.s32 %s14, 2
      %s21 = sadd.s32 %s14, 1
      %s22 = ssub.s32 %s14, %s21
      %p23 = scmp.eq.s32.totalorder %s22, 0
      %s25 = sadd.s32 %s24, 1
      %s26 = scalar_select %p23, %s24, %s25
      %p29 = pneg %p23
      %p30 = scmp.eq.s32.totalorder %s14, 1
      %p31 = por %p29, %p30
      %p32 = scmp.ne.s32.totalorder %s24, %s27
      %p33 = scmp.eq.s32.totalorder %s14, 0
      %p34 = por %p32, %p33
      %p35 = scmp.ne.s32.totalorder %s24, %s27
      %p36 = scmp.eq.s32.totalorder %s19, 1
      %p37 = por %p35, %p36
      %p38 = scmp.ne.s32.totalorder %s27, %s28
      %p39 = scmp.eq.s32.totalorder %s19, 0
      %p40 = por %p38, %p39
      %p41 = scmp.ne.s32.totalorder %s27, %s28
      %p42 = scmp.eq.s32.totalorder %s20, 1
      %p43 = por %p41, %p42
      %p45 = scmp.ne.s32.totalorder %s28, %s44
      %p46 = scmp.eq.s32.totalorder %s20, 0
      %p47 = por %p45, %p46
      %s49 = sadd.s32 %s48, 1
      %p52 = scmp.eq.s32.totalorder %s14, 1
      %p53 = scmp.ne.s32.totalorder %s48, %s50
      %p54 = scmp.eq.s32.totalorder %s14, 0
      %p55 = por %p53, %p54
      %p56 = scmp.ne.s32.totalorder %s48, %s50
      %p57 = scmp.eq.s32.totalorder %s19, 1
      %p58 = por %p56, %p57
      %p59 = scmp.ne.s32.totalorder %s50, %s51
      %p60 = scmp.eq.s32.totalorder %s19, 0
      %p61 = por %p59, %p60
      %p62 = scmp.ne.s32.totalorder %s50, %s51
      %p63 = scmp.eq.s32.totalorder %s20, 1
      %p64 = por %p62, %p63
      %p66 = scmp.ne.s32.totalorder %s51, %s65
      %p67 = scmp.eq.s32.totalorder %s20, 0
      %p68 = por %p66, %p67
      %s70 = sadd.s32 %s69, 1
      %p73 = scmp.eq.s32.totalorder %s14, 1
      %p74 = scmp.ne.s32.totalorder %s69, %s71
      %p75 = scmp.eq.s32.totalorder %s14, 0
      %p76 = por %p74, %p75
      %p77 = scmp.ne.s32.totalorder %s69, %s71
      %p78 = scmp.eq.s32.totalorder %s19, 1
      %p79 = por %p77, %p78
      %p80 = scmp.ne.s32.totalorder %s71, %s72
      %p81 = scmp.eq.s32.totalorder %s19, 0
      %p82 = por %p80, %p81
      %p83 = scmp.ne.s32.totalorder %s71, %s72
      %p84 = scmp.eq.s32.totalorder %s20, 1
      %p85 = por %p83, %p84
      %p87 = scmp.ne.s32.totalorder %s72, %s86
      %p88 = scmp.eq.s32.totalorder %s20, 0
      %p89 = por %p87, %p88
      %s91 = sadd.s32 %s90, 1
      %p94 = scmp.eq.s32.totalorder %s14, 1
      %p95 = scmp.ne.s32.totalorder %s90, %s92
      %p96 = scmp.eq.s32.totalorder %s14, 0
      %p97 = por %p95, %p96
      %p98 = scmp.ne.s32.totalorder %s90, %s92
      %p99 = scmp.eq.s32.totalorder %s19, 1
      %p100 = por %p98, %p99
      %p101 = scmp.ne.s32.totalorder %s92, %s93
      %p102 = scmp.eq.s32.totalorder %s19, 0
      %p103 = por %p101, %p102
      %p104 = scmp.ne.s32.totalorder %s92, %s93
      %p105 = scmp.eq.s32.totalorder %s20, 1
      %p106 = por %p104, %p105
      %p108 = scmp.ne.s32.totalorder %s93, %s107
      %p109 = scmp.eq.s32.totalorder %s20, 0
      %p110 = por %p108, %p109
      %s112 = sadd.s32 %s111, 1
      %p115 = scmp.eq.s32.totalorder %s14, 1
      %p116 = scmp.ne.s32.totalorder %s111, %s113
      %p117 = scmp.eq.s32.totalorder %s14, 0
      %p118 = por %p116, %p117
      %p119 = scmp.ne.s32.totalorder %s111, %s113
      %p120 = scmp.eq.s32.totalorder %s19, 1
      %p121 = por %p119, %p120
      %p122 = scmp.ne.s32.totalorder %s113, %s114
      %p123 = scmp.eq.s32.totalorder %s19, 0
      %p124 = por %p122, %p123
      %p125 = scmp.ne.s32.totalorder %s113, %s114
      %p126 = scmp.eq.s32.totalorder %s20, 1
      %p127 = por %p125, %p126
      %p129 = scmp.ne.s32.totalorder %s114, %s128
      %p130 = scmp.eq.s32.totalorder %s20, 0
      %p131 = por %p129, %p130
      %s132 = ssub.s32 %s14, %s21
      %p133 = scmp.eq.s32.totalorder %s132, 0
      %s135 = sadd.s32 %s134, 1
      %s136 = scalar_select %p133, %s134, %s135
      %p139 = pneg %p133
      %p140 = scmp.eq.s32.totalorder %s14, 1
      %p141 = por %p139, %p140
      %p142 = scmp.ne.s32.totalorder %s134, %s137
      %p143 = scmp.eq.s32.totalorder %s14, 0
      %p144 = por %p142, %p143
      %p145 = scmp.ne.s32.totalorder %s134, %s137
      %p146 = scmp.eq.s32.totalorder %s19, 1
      %p147 = por %p145, %p146
      %p148 = scmp.ne.s32.totalorder %s137, %s138
      %p149 = scmp.eq.s32.totalorder %s19, 0
      %p150 = por %p148, %p149
      %p151 = scmp.ne.s32.totalorder %s137, %s138
      %p152 = scmp.eq.s32.totalorder %s20, 1
      %p153 = por %p151, %p152
      %p155 = scmp.ne.s32.totalorder %s138, %s154
      %p156 = scmp.eq.s32.totalorder %s20, 0
      %p157 = por %p155, %p156
      %p158 = scmp.le.s32.totalorder 1, %s14
      %p159 = scmp.lt.s32.totalorder %s14, 3
      %p160 = pnand %p158, %p159
      %p161 = pneg %p160
      // Predicated region
      $region9: #{tpu_custom_call.1} parent=5 // pred_check
        _
      $region10: #{tpu_custom_call.1} parent=5 // pred_check_branch
        %163 = sbr.rel (%p160) target = $region12
      $region11: #{tpu_custom_call.1} parent=5 // pred_region
        %s164 = ssub.s32 %s14, 1
        // Predicated region
        $region13: #{tpu_custom_call.1} parent=11 // pred_check
          %p165 = pneg %p61
        $region14: #{tpu_custom_call.1} parent=11 // pred_check_branch
          %167 = sbr.rel (%p165) target = $region16
        $region15: #{tpu_custom_call.1} parent=11 // pred_region
          _
        $region16: #{tpu_custom_call.1} parent=11 // pred_fallthru
          _
        // Predicated region
        $region17: #{tpu_custom_call.1} parent=11 // pred_check
          %p168 = pneg %p82
        $region18: #{tpu_custom_call.1} parent=11 // pred_check_branch
          %170 = sbr.rel (%p168) target = $region20
        $region19: #{tpu_custom_call.1} parent=11 // pred_region
          _
        $region20: #{tpu_custom_call.1} parent=11 // pred_fallthru
          _
        // Predicated region
        $region21: #{tpu_custom_call.1} parent=11 // pred_check
          %p171 = pneg %p103
        $region22: #{tpu_custom_call.1} parent=11 // pred_check_branch
          %173 = sbr.rel (%p171) target = $region24
        $region23: #{tpu_custom_call.1} parent=11 // pred_region
          _
        $region24: #{tpu_custom_call.1} parent=11 // pred_fallthru
          _
        // Predicated region
        $region25: #{tpu_custom_call.1} parent=11 // pred_check
          %p174 = pneg %p124
        $region26: #{tpu_custom_call.1} parent=11 // pred_check_branch
          %176 = sbr.rel (%p174) target = $region28
        $region27: #{tpu_custom_call.1} parent=11 // pred_region
          _
        $region28: #{tpu_custom_call.1} parent=11 // pred_fallthru
          _
      $region12: #{tpu_custom_call.1} parent=5 // pred_fallthru
        _
      %p177 = scmp.lt.s32.totalorder %s14, 2
      // Predicated region
      $region29: #{tpu_custom_call.1} parent=5 // pred_check
        %p178 = pneg %p177
      $region30: #{tpu_custom_call.1} parent=5 // pred_check_branch
        %180 = sbr.rel (%p178) target = $region32
      $region31: #{tpu_custom_call.1} parent=5 // pred_region
        // Predicated region
        $region33: #{tpu_custom_call.1} parent=31 // pred_check
          %p181 = pneg %p34
        $region34: #{tpu_custom_call.1} parent=31 // pred_check_branch
          %183 = sbr.rel (%p181) target = $region36
        $region35: #{tpu_custom_call.1} parent=31 // pred_region
          %p184 = scmp.lt.s32.totalorder %s14, 1
          %s185 = scalar_select %p184, %s14, 1
          %s186 = smul.addr %s185, 72
          %s187 = smul.addr %s186, 4
          %s188 = scalar_lea.vmem %s0, %s187
        $region36: #{tpu_custom_call.1} parent=31 // pred_fallthru
          _
      $region32: #{tpu_custom_call.1} parent=5 // pred_fallthru
        _
      %p189 = scmp.le.s32.totalorder 1, %s14
      %p190 = scmp.lt.s32.totalorder %s14, 3
      %p191 = pnand %p189, %p190
      %p192 = pneg %p191
      // Predicated region
      $region37: #{tpu_custom_call.1} parent=5 // pred_check
        _
      $region38: #{tpu_custom_call.1} parent=5 // pred_check_branch
        %194 = sbr.rel (%p191) target = $region40
      $region39: #{tpu_custom_call.1} parent=5 // pred_region
        %s195 = ssub.s32 %s14, 1
        %p196 = scmp.lt.s32.totalorder %s19, 1
        %s197 = scalar_select %p196, %s19, 1
        %s198 = smul.addr %s197, 72
        %s199 = smul.addr %s198, 4
        %s200 = scalar_lea.vmem %s0, %s199
        %p201 = pneg %p40
        %p202 = pneg %p37
        %p203 = pneg %p61
        %p204 = pneg %p58
        %p205 = pneg %p82
        %p206 = pneg %p79
        %p207 = pneg %p103
        %p208 = pneg %p100
        %p209 = pneg %p124
        %p210 = pneg %p121
        %p211 = pneg %p150
        %p212 = pneg %p147
        %s213 = sand.u32 %s137, 1
        %s214 = scalar_lea.sflag [#allocation3], %s213
        %s215 = sand.u32 %s137, 1
        %s216 = smul.addr %s215, 64
        %s217 = scalar_lea.vmem [#allocation2], %s216
        %p218 = scmp.lt.s32.totalorder %s19, 1
        %s219 = scalar_select %p218, %s19, 1
        %s220 = smul.addr %s219, 72
        %s221 = smul.addr %s220, 4
        %s222 = scalar_lea.vmem %s0, %s221
        %v223 = vld [vmem:[%s222] sm:$0xf]
        %v224 = vld [vmem:[%s222 + $0x4] sm:$0x1]
        %v225 = vld [vmem:[%s222 + $0x8] sm:$0xf]
        %v226 = vld [vmem:[%s222 + $0xc] sm:$0x1]
        %v227 = vld [vmem:[%s222 + $0x10] sm:$0xf]
        %v228 = vld [vmem:[%s222 + $0x14] sm:$0x1]
        %v229 = vld [vmem:[%s222 + $0x18] sm:$0xf]
        %v230 = vld [vmem:[%s222 + $0x1c] sm:$0x1]
        %v231 = vld [vmem:[%s222 + $0x20] sm:$0xf]
        %v232 = vld [vmem:[%s222 + $0x24] sm:$0x1]
        %v233 = vld [vmem:[%s222 + $0x28] sm:$0xf]
        %v234 = vld [vmem:[%s222 + $0x2c] sm:$0x1]
        %v235 = vld [vmem:[%s222 + $0x30] sm:$0xf]
        %v236 = vld [vmem:[%s222 + $0x34] sm:$0x1]
        %v237 = vld [vmem:[%s222 + $0x38] sm:$0xf]
        %v238 = vld [vmem:[%s222 + $0x3c] sm:$0x1]
        %v239 = vld [vmem:[%s222 + $0x40] sm:$0xf]
        %v240 = vld [vmem:[%s222 + $0x44] sm:$0x1]
        %v241 = vld [vmem:[%s222 + $0x48] sm:$0xf]
        %v242 = vld [vmem:[%s222 + $0x50] sm:$0xf]
        %v243 = vld [vmem:[%s222 + $0x58] sm:$0xf]
        %v244 = vld [vmem:[%s222 + $0x60] sm:$0xf]
        %v245 = vld [vmem:[%s222 + $0x68] sm:$0xf]
        %v246 = vld [vmem:[%s222 + $0x70] sm:$0xf]
        %v247 = vld [vmem:[%s222 + $0x78] sm:$0xf]
        %v248 = vld [vmem:[%s222 + $0x80] sm:$0xf]
        %v249 = vld [vmem:[%s222 + $0x88] sm:$0xf]
        %v250 = vld [vmem:[%s222 + $0x90] sm:$0xf]
        %v251 = vld [vmem:[%s222 + $0x94] sm:$0x1]
        %v252 = vld [vmem:[%s222 + $0x98] sm:$0xf]
        %v253 = vld [vmem:[%s222 + $0x9c] sm:$0x1]
        %v254 = vld [vmem:[%s222 + $0xa0] sm:$0xf]
        %v255 = vld [vmem:[%s222 + $0xa4] sm:$0x1]
        %v256 = vld [vmem:[%s222 + $0xa8] sm:$0xf]
        %v257 = vld [vmem:[%s222 + $0xac] sm:$0x1]
        %v258 = vld [vmem:[%s222 + $0xb0] sm:$0xf]
        %v259 = vld [vmem:[%s222 + $0xb4] sm:$0x1]
        %v260 = vld [vmem:[%s222 + $0xb8] sm:$0xf]
        %v261 = vld [vmem:[%s222 + $0xbc] sm:$0x1]
        %v262 = vld [vmem:[%s222 + $0xc0] sm:$0xf]
        %v263 = vld [vmem:[%s222 + $0xc4] sm:$0x1]
        %v264 = vld [vmem:[%s222 + $0xc8] sm:$0xf]
        %v265 = vld [vmem:[%s222 + $0xcc] sm:$0x1]
        %v266 = vld [vmem:[%s222 + $0xd8] sm:$0xf]
        %v267 = vld [vmem:[%s222 + $0xe0] sm:$0xf]
        %v268 = vld [vmem:[%s222 + $0xe8] sm:$0xf]
        %v269 = vld [vmem:[%s222 + $0xf0] sm:$0xf]
        %v270 = vld [vmem:[%s222 + $0xf8] sm:$0xf]
        %v271 = vld [vmem:[%s222 + $0x100] sm:$0xf]
        %v272 = vld [vmem:[%s222 + $0x108] sm:$0xf]
        %v273 = vld [vmem:[%s222 + $0x110] sm:$0xf]
        %v274 = vunpack.c.l.bf16 %v223
        %v275 = vunpack.c.l.bf16 %v224
        %v276 = vunpack.c.l.bf16 %v225
        %v277 = vunpack.c.l.bf16 %v226
        %v278 = vunpack.c.l.bf16 %v227
        %v279 = vunpack.c.l.bf16 %v228
        %v280 = vunpack.c.l.bf16 %v229
        %v281 = vunpack.c.l.bf16 %v230
        %v282 = vunpack.c.l.bf16 %v231
        %v283 = vunpack.c.l.bf16 %v232
        %v284 = vunpack.c.l.bf16 %v233
        %v285 = vunpack.c.l.bf16 %v234
        %v286 = vunpack.c.l.bf16 %v235
        %v287 = vunpack.c.l.bf16 %v236
        %v288 = vunpack.c.l.bf16 %v237
        %v289 = vunpack.c.l.bf16 %v238
        %v290 = vunpack.c.l.bf16 %v239
        %v291 = vunpack.c.l.bf16 %v240
        %v292 = vunpack.c.l.bf16 %v241
        %v293 = vunpack.c.l.bf16 %v242
        %v294 = vunpack.c.l.bf16 %v243
        %v295 = vunpack.c.l.bf16 %v244
        %v296 = vunpack.c.l.bf16 %v245
        %v297 = vunpack.c.l.bf16 %v246
        %v298 = vunpack.c.l.bf16 %v247
        %v299 = vunpack.c.l.bf16 %v248
        %v300 = vunpack.c.l.bf16 %v249
        %v301 = vunpack.c.l.bf16 %v250
        %v302 = vunpack.c.l.bf16 %v251
        %v303 = vunpack.c.l.bf16 %v252
        %v304 = vunpack.c.l.bf16 %v253
        %v305 = vunpack.c.l.bf16 %v254
        %v306 = vunpack.c.l.bf16 %v255
        %v307 = vunpack.c.l.bf16 %v256
        %v308 = vunpack.c.l.bf16 %v257
        %v309 = vunpack.c.l.bf16 %v258
        %v310 = vunpack.c.l.bf16 %v259
        %v311 = vunpack.c.l.bf16 %v260
        %v312 = vunpack.c.l.bf16 %v261
        %v313 = vunpack.c.l.bf16 %v262
        %v314 = vunpack.c.l.bf16 %v263
        %v315 = vunpack.c.l.bf16 %v264
        %v316 = vunpack.c.l.bf16 %v265
        %v317 = vunpack.c.l.bf16 %v266
        %v318 = vunpack.c.l.bf16 %v267
        %v319 = vunpack.c.l.bf16 %v268
        %v320 = vunpack.c.l.bf16 %v269
        %v321 = vunpack.c.l.bf16 %v270
        %v322 = vunpack.c.l.bf16 %v271
        %v323 = vunpack.c.l.bf16 %v272
        %v324 = vunpack.c.l.bf16 %v273
        %v325 = vld [vmem:[%s1] sm:$0x1]
        %v326 = vld [vmem:[%s1 + $0x1] sm:$0x1]
        %v327 = vld [vmem:[%s1 + $0x2] sm:$0x1]
        %v328 = vld [vmem:[%s1 + $0x3] sm:$0x1]
        %v329 = vld [vmem:[%s1 + $0x4] sm:$0x1]
        %v330 = vld [vmem:[%s1 + $0x5] sm:$0x1]
        %v331 = vld [vmem:[%s1 + $0x6] sm:$0x1]
        %v332 = vld [vmem:[%s1 + $0x7] sm:$0x1]
        %v333 = vld [vmem:[%s1 + $0x8] sm:$0x1]
        %v335 = vperm.slane %v325, 0
        %v337 = vmul.f32 %v274, %v335
        %v338 = vmul.f32 %v276, %v335
        %v339 = vmul.f32 %v278, %v335
        %v340 = vmul.f32 %v280, %v335
        %v341 = vmul.f32 %v282, %v335
        %v342 = vmul.f32 %v284, %v335
        %v343 = vmul.f32 %v286, %v335
        %v344 = vmul.f32 %v288, %v335
        %v345 = vadd.f32 %v337, 0.0
        %v346 = vadd.f32 %v338, 0.0
        %v347 = vadd.f32 %v339, 0.0
        %v348 = vadd.f32 %v340, 0.0
        %v349 = vadd.f32 %v341, 0.0
        %v350 = vadd.f32 %v342, 0.0
        %v351 = vadd.f32 %v343, 0.0
        %v352 = vadd.f32 %v344, 0.0
        %v354 = vperm.slane %v326, 0
        %v356 = vmul.f32 %v292, %v354
        %v357 = vmul.f32 %v293, %v354
        %v358 = vmul.f32 %v294, %v354
        %v359 = vmul.f32 %v295, %v354
        %v360 = vmul.f32 %v296, %v354
        %v361 = vmul.f32 %v297, %v354
        %v362 = vmul.f32 %v298, %v354
        %v363 = vmul.f32 %v299, %v354
        %v364 = vadd.f32 %v345, %v356
        %v365 = vadd.f32 %v346, %v357
        %v366 = vadd.f32 %v347, %v358
        %v367 = vadd.f32 %v348, %v359
        %v368 = vadd.f32 %v349, %v360
        %v369 = vadd.f32 %v350, %v361
        %v370 = vadd.f32 %v351, %v362
        %v371 = vadd.f32 %v352, %v363
        %v373 = vperm.slane %v327, 0
        %v375 = vmul.f32 %v274, %v373
        %v376 = vmul.f32 %v275, %v373
        %v377 = vmul.f32 %v276, %v373
        %v378 = vmul.f32 %v277, %v373
        %v379 = vmul.f32 %v278, %v373
        %v380 = vmul.f32 %v279, %v373
        %v381 = vmul.f32 %v280, %v373
        %v382 = vmul.f32 %v281, %v373
        %v383 = vmul.f32 %v282, %v373
        %v384 = vmul.f32 %v283, %v373
        %v385 = vmul.f32 %v284, %v373
        %v386 = vmul.f32 %v285, %v373
        %v387 = vmul.f32 %v286, %v373
        %v388 = vmul.f32 %v287, %v373
        %v389 = vmul.f32 %v288, %v373
        %v390 = vmul.f32 %v289, %v373
        %vm407 = vcmask 1046528
        %v408 = vrot.slane %v375, 1
        %v409 = vrot.slane %v376, 1
        %v410 = vsel %vm407, %v408, %v409
        %v411 = vrot.slane %v377, 1
        %v412 = vrot.slane %v378, 1
        %v413 = vsel %vm407, %v411, %v412
        %v414 = vrot.slane %v379, 1
        %v415 = vrot.slane %v380, 1
        %v416 = vsel %vm407, %v414, %v415
        %v417 = vrot.slane %v381, 1
        %v418 = vrot.slane %v382, 1
        %v419 = vsel %vm407, %v417, %v418
        %v420 = vrot.slane %v383, 1
        %v421 = vrot.slane %v384, 1
        %v422 = vsel %vm407, %v420, %v421
        %v423 = vrot.slane %v385, 1
        %v424 = vrot.slane %v386, 1
        %v425 = vsel %vm407, %v423, %v424
        %v426 = vrot.slane %v387, 1
        %v427 = vrot.slane %v388, 1
        %v428 = vsel %vm407, %v426, %v427
        %v429 = vrot.slane %v389, 1
        %v430 = vrot.slane %v390, 1
        %v431 = vsel %vm407, %v429, %v430
        %v440 = vadd.f32 %v364, %v410
        %v441 = vadd.f32 %v365, %v413
        %v442 = vadd.f32 %v366, %v416
        %v443 = vadd.f32 %v367, %v419
        %v444 = vadd.f32 %v368, %v422
        %v445 = vadd.f32 %v369, %v425
        %v446 = vadd.f32 %v370, %v428
        %v447 = vadd.f32 %v371, %v431
        %v449 = vperm.slane %v328, 0
        %v451 = vmul.f32 %v301, %v449
        %v452 = vmul.f32 %v303, %v449
        %v453 = vmul.f32 %v305, %v449
        %v454 = vmul.f32 %v307, %v449
        %v455 = vmul.f32 %v309, %v449
        %v456 = vmul.f32 %v311, %v449
        %v457 = vmul.f32 %v313, %v449
        %v458 = vmul.f32 %v315, %v449
        %v459 = vadd.f32 %v440, %v451
        %v460 = vadd.f32 %v441, %v452
        %v461 = vadd.f32 %v442, %v453
        %v462 = vadd.f32 %v443, %v454
        %v463 = vadd.f32 %v444, %v455
        %v464 = vadd.f32 %v445, %v456
        %v465 = vadd.f32 %v446, %v457
        %v466 = vadd.f32 %v447, %v458
        %v468 = vperm.slane %v329, 0
        %v470 = vmul.f32 %v317, %v468
        %v471 = vmul.f32 %v318, %v468
        %v472 = vmul.f32 %v319, %v468
        %v473 = vmul.f32 %v320, %v468
        %v474 = vmul.f32 %v321, %v468
        %v475 = vmul.f32 %v322, %v468
        %v476 = vmul.f32 %v323, %v468
        %v477 = vmul.f32 %v324, %v468
        %v478 = vadd.f32 %v459, %v470
        %v479 = vadd.f32 %v460, %v471
        %v480 = vadd.f32 %v461, %v472
        %v481 = vadd.f32 %v462, %v473
        %v482 = vadd.f32 %v463, %v474
        %v483 = vadd.f32 %v464, %v475
        %v484 = vadd.f32 %v465, %v476
        %v485 = vadd.f32 %v466, %v477
        %v487 = vperm.slane %v330, 0
        %v489 = vmul.f32 %v301, %v487
        %v490 = vmul.f32 %v302, %v487
        %v491 = vmul.f32 %v303, %v487
        %v492 = vmul.f32 %v304, %v487
        %v493 = vmul.f32 %v305, %v487
        %v494 = vmul.f32 %v306, %v487
        %v495 = vmul.f32 %v307, %v487
        %v496 = vmul.f32 %v308, %v487
        %v497 = vmul.f32 %v309, %v487
        %v498 = vmul.f32 %v310, %v487
        %v499 = vmul.f32 %v311, %v487
        %v500 = vmul.f32 %v312, %v487
        %v501 = vmul.f32 %v313, %v487
        %v502 = vmul.f32 %v314, %v487
        %v503 = vmul.f32 %v315, %v487
        %v504 = vmul.f32 %v316, %v487
        %v521 = vrot.slane %v489, 1
        %v522 = vrot.slane %v490, 1
        %v523 = vsel %vm407, %v521, %v522
        %v524 = vrot.slane %v491, 1
        %v525 = vrot.slane %v492, 1
        %v526 = vsel %vm407, %v524, %v525
        %v527 = vrot.slane %v493, 1
        %v528 = vrot.slane %v494, 1
        %v529 = vsel %vm407, %v527, %v528
        %v530 = vrot.slane %v495, 1
        %v531 = vrot.slane %v496, 1
        %v532 = vsel %vm407, %v530, %v531
        %v533 = vrot.slane %v497, 1
        %v534 = vrot.slane %v498, 1
        %v535 = vsel %vm407, %v533, %v534
        %v536 = vrot.slane %v499, 1
        %v537 = vrot.slane %v500, 1
        %v538 = vsel %vm407, %v536, %v537
        %v539 = vrot.slane %v501, 1
        %v540 = vrot.slane %v502, 1
        %v541 = vsel %vm407, %v539, %v540
        %v542 = vrot.slane %v503, 1
        %v543 = vrot.slane %v504, 1
        %v544 = vsel %vm407, %v542, %v543
        %v553 = vadd.f32 %v478, %v523
        %v554 = vadd.f32 %v479, %v526
        %v555 = vadd.f32 %v480, %v529
        %v556 = vadd.f32 %v481, %v532
        %v557 = vadd.f32 %v482, %v535
        %v558 = vadd.f32 %v483, %v538
        %v559 = vadd.f32 %v484, %v541
        %v560 = vadd.f32 %v485, %v544
        %v562 = vperm.slane %v331, 0
        %v564 = vmul.f32 %v276, %v562
        %v565 = vmul.f32 %v278, %v562
        %v566 = vmul.f32 %v280, %v562
        %v567 = vmul.f32 %v282, %v562
        %v568 = vmul.f32 %v284, %v562
        %v569 = vmul.f32 %v286, %v562
        %v570 = vmul.f32 %v288, %v562
        %v571 = vmul.f32 %v290, %v562
        %v572 = vadd.f32 %v553, %v564
        %v573 = vadd.f32 %v554, %v565
        %v574 = vadd.f32 %v555, %v566
        %v575 = vadd.f32 %v556, %v567
        %v576 = vadd.f32 %v557, %v568
        %v577 = vadd.f32 %v558, %v569
        %v578 = vadd.f32 %v559, %v570
        %v579 = vadd.f32 %v560, %v571
        %v581 = vperm.slane %v332, 0
        %v583 = vmul.f32 %v293, %v581
        %v584 = vmul.f32 %v294, %v581
        %v585 = vmul.f32 %v295, %v581
        %v586 = vmul.f32 %v296, %v581
        %v587 = vmul.f32 %v297, %v581
        %v588 = vmul.f32 %v298, %v581
        %v589 = vmul.f32 %v299, %v581
        %v590 = vmul.f32 %v300, %v581
        %v591 = vadd.f32 %v572, %v583
        %v592 = vadd.f32 %v573, %v584
        %v593 = vadd.f32 %v574, %v585
        %v594 = vadd.f32 %v575, %v586
        %v595 = vadd.f32 %v576, %v587
        %v596 = vadd.f32 %v577, %v588
        %v597 = vadd.f32 %v578, %v589
        %v598 = vadd.f32 %v579, %v590
        %v600 = vperm.slane %v333, 0
        %v602 = vmul.f32 %v276, %v600
        %v603 = vmul.f32 %v277, %v600
        %v604 = vmul.f32 %v278, %v600
        %v605 = vmul.f32 %v279, %v600
        %v606 = vmul.f32 %v280, %v600
        %v607 = vmul.f32 %v281, %v600
        %v608 = vmul.f32 %v282, %v600
        %v609 = vmul.f32 %v283, %v600
        %v610 = vmul.f32 %v284, %v600
        %v611 = vmul.f32 %v285, %v600
        %v612 = vmul.f32 %v286, %v600
        %v613 = vmul.f32 %v287, %v600
        %v614 = vmul.f32 %v288, %v600
        %v615 = vmul.f32 %v289, %v600
        %v616 = vmul.f32 %v290, %v600
        %v617 = vmul.f32 %v291, %v600
        %v634 = vrot.slane %v602, 1
        %v635 = vrot.slane %v603, 1
        %v636 = vsel %vm407, %v634, %v635
        %v637 = vrot.slane %v604, 1
        %v638 = vrot.slane %v605, 1
        %v639 = vsel %vm407, %v637, %v638
        %v640 = vrot.slane %v606, 1
        %v641 = vrot.slane %v607, 1
        %v642 = vsel %vm407, %v640, %v641
        %v643 = vrot.slane %v608, 1
        %v644 = vrot.slane %v609, 1
        %v645 = vsel %vm407, %v643, %v644
        %v646 = vrot.slane %v610, 1
        %v647 = vrot.slane %v611, 1
        %v648 = vsel %vm407, %v646, %v647
        %v649 = vrot.slane %v612, 1
        %v650 = vrot.slane %v613, 1
        %v651 = vsel %vm407, %v649, %v650
        %v652 = vrot.slane %v614, 1
        %v653 = vrot.slane %v615, 1
        %v654 = vsel %vm407, %v652, %v653
        %v655 = vrot.slane %v616, 1
        %v656 = vrot.slane %v617, 1
        %v657 = vsel %vm407, %v655, %v656
        %v666 = vadd.f32 %v591, %v636
        %v667 = vadd.f32 %v592, %v639
        %v668 = vadd.f32 %v593, %v642
        %v669 = vadd.f32 %v594, %v645
        %v670 = vadd.f32 %v595, %v648
        %v671 = vadd.f32 %v596, %v651
        %v672 = vadd.f32 %v597, %v654
        %v673 = vadd.f32 %v598, %v657
        %v674 = vld [vmem:[%s2] sm:$0x1]
        %v676 = vperm.slane %v674, 0
        %v678 = vadd.f32 %v666, %v676
        %v679 = vadd.f32 %v667, %v676
        %v680 = vadd.f32 %v668, %v676
        %v681 = vadd.f32 %v669, %v676
        %v682 = vadd.f32 %v670, %v676
        %v683 = vadd.f32 %v671, %v676
        %v684 = vadd.f32 %v672, %v676
        %v685 = vadd.f32 %v673, %v676
        %v686 = vmax.f32 %v678, 0.0
        %v687 = vmax.f32 %v679, 0.0
        %v688 = vmax.f32 %v680, 0.0
        %v689 = vmax.f32 %v681, 0.0
        %v690 = vmax.f32 %v682, 0.0
        %v691 = vmax.f32 %v683, 0.0
        %v692 = vmax.f32 %v684, 0.0
        %v693 = vmax.f32 %v685, 0.0
        %v694 = vld [vmem:[%s3] sm:$0x1]
        %v695 = vld [vmem:[%s3 + $0x1] sm:$0x1]
        %v696 = vld [vmem:[%s3 + $0x2] sm:$0x1]
        %v697 = vld [vmem:[%s3 + $0x3] sm:$0x1]
        %699 = vset.pattern.permute.xlu0 0
        %700 = vperm.xlu0 %699, %v686
        %v701 = vpop.permute.xlu0 %700
        %704 = vset.pattern.permute.xlu0 0
        %705 = vperm.xlu0 %704, %v687
        %v706 = vpop.permute.xlu0 %705
        %709 = vset.pattern.permute.xlu0 0
        %710 = vperm.xlu0 %709, %v688
        %v711 = vpop.permute.xlu0 %710
        %714 = vset.pattern.permute.xlu0 0
        %715 = vperm.xlu0 %714, %v689
        %v716 = vpop.permute.xlu0 %715
        %719 = vset.pattern.permute.xlu0 0
        %720 = vperm.xlu0 %719, %v690
        %v721 = vpop.permute.xlu0 %720
        %724 = vset.pattern.permute.xlu0 0
        %725 = vperm.xlu0 %724, %v691
        %v726 = vpop.permute.xlu0 %725
        %729 = vset.pattern.permute.xlu0 0
        %730 = vperm.xlu0 %729, %v692
        %v731 = vpop.permute.xlu0 %730
        %734 = vset.pattern.permute.xlu0 0
        %735 = vperm.xlu0 %734, %v693
        %v736 = vpop.permute.xlu0 %735
        %v739 = vperm.slane %v694, 0
        %v741 = vmul.f32 %v701, %v739
        %v742 = vmul.f32 %v706, %v739
        %v743 = vmul.f32 %v711, %v739
        %v744 = vmul.f32 %v716, %v739
        %v745 = vmul.f32 %v721, %v739
        %v746 = vmul.f32 %v726, %v739
        %v747 = vmul.f32 %v731, %v739
        %v748 = vmul.f32 %v736, %v739
        %749 = vset.pattern.permute.xlu0 1
        %750 = vperm.xlu0 %749, %v686
        %v751 = vpop.permute.xlu0 %750
        %753 = vset.pattern.permute.xlu0 1
        %754 = vperm.xlu0 %753, %v687
        %v755 = vpop.permute.xlu0 %754
        %757 = vset.pattern.permute.xlu0 1
        %758 = vperm.xlu0 %757, %v688
        %v759 = vpop.permute.xlu0 %758
        %761 = vset.pattern.permute.xlu0 1
        %762 = vperm.xlu0 %761, %v689
        %v763 = vpop.permute.xlu0 %762
        %765 = vset.pattern.permute.xlu0 1
        %766 = vperm.xlu0 %765, %v690
        %v767 = vpop.permute.xlu0 %766
        %769 = vset.pattern.permute.xlu0 1
        %770 = vperm.xlu0 %769, %v691
        %v771 = vpop.permute.xlu0 %770
        %773 = vset.pattern.permute.xlu0 1
        %774 = vperm.xlu0 %773, %v692
        %v775 = vpop.permute.xlu0 %774
        %777 = vset.pattern.permute.xlu0 1
        %778 = vperm.xlu0 %777, %v693
        %v779 = vpop.permute.xlu0 %778
        %v782 = vperm.slane %v695, 0
        %v784 = vmul.f32 %v751, %v782
        %v785 = vmul.f32 %v755, %v782
        %v786 = vmul.f32 %v759, %v782
        %v787 = vmul.f32 %v763, %v782
        %v788 = vmul.f32 %v767, %v782
        %v789 = vmul.f32 %v771, %v782
        %v790 = vmul.f32 %v775, %v782
        %v791 = vmul.f32 %v779, %v782
        %v792 = vadd.f32 %v741, %v784
        %v793 = vadd.f32 %v742, %v785
        %v794 = vadd.f32 %v743, %v786
        %v795 = vadd.f32 %v744, %v787
        %v796 = vadd.f32 %v745, %v788
        %v797 = vadd.f32 %v746, %v789
        %v798 = vadd.f32 %v747, %v790
        %v799 = vadd.f32 %v748, %v791
        %800 = vset.pattern.permute.xlu0 2
        %801 = vperm.xlu0 %800, %v686
        %v802 = vpop.permute.xlu0 %801
        %804 = vset.pattern.permute.xlu0 2
        %805 = vperm.xlu0 %804, %v687
        %v806 = vpop.permute.xlu0 %805
        %808 = vset.pattern.permute.xlu0 2
        %809 = vperm.xlu0 %808, %v688
        %v810 = vpop.permute.xlu0 %809
        %812 = vset.pattern.permute.xlu0 2
        %813 = vperm.xlu0 %812, %v689
        %v814 = vpop.permute.xlu0 %813
        %816 = vset.pattern.permute.xlu0 2
        %817 = vperm.xlu0 %816, %v690
        %v818 = vpop.permute.xlu0 %817
        %820 = vset.pattern.permute.xlu0 2
        %821 = vperm.xlu0 %820, %v691
        %v822 = vpop.permute.xlu0 %821
        %824 = vset.pattern.permute.xlu0 2
        %825 = vperm.xlu0 %824, %v692
        %v826 = vpop.permute.xlu0 %825
        %828 = vset.pattern.permute.xlu0 2
        %829 = vperm.xlu0 %828, %v693
        %v830 = vpop.permute.xlu0 %829
        %v833 = vperm.slane %v696, 0
        %v835 = vmul.f32 %v802, %v833
        %v836 = vmul.f32 %v806, %v833
        %v837 = vmul.f32 %v810, %v833
        %v838 = vmul.f32 %v814, %v833
        %v839 = vmul.f32 %v818, %v833
        %v840 = vmul.f32 %v822, %v833
        %v841 = vmul.f32 %v826, %v833
        %v842 = vmul.f32 %v830, %v833
        %v843 = vadd.f32 %v792, %v835
        %v844 = vadd.f32 %v793, %v836
        %v845 = vadd.f32 %v794, %v837
        %v846 = vadd.f32 %v795, %v838
        %v847 = vadd.f32 %v796, %v839
        %v848 = vadd.f32 %v797, %v840
        %v849 = vadd.f32 %v798, %v841
        %v850 = vadd.f32 %v799, %v842
        %851 = vset.pattern.permute.xlu0 3
        %852 = vperm.xlu0 %851, %v686
        %v853 = vpop.permute.xlu0 %852
        %855 = vset.pattern.permute.xlu0 3
        %856 = vperm.xlu0 %855, %v687
        %v857 = vpop.permute.xlu0 %856
        %859 = vset.pattern.permute.xlu0 3
        %860 = vperm.xlu0 %859, %v688
        %v861 = vpop.permute.xlu0 %860
        %863 = vset.pattern.permute.xlu0 3
        %864 = vperm.xlu0 %863, %v689
        %v865 = vpop.permute.xlu0 %864
        %867 = vset.pattern.permute.xlu0 3
        %868 = vperm.xlu0 %867, %v690
        %v869 = vpop.permute.xlu0 %868
        %871 = vset.pattern.permute.xlu0 3
        %872 = vperm.xlu0 %871, %v691
        %v873 = vpop.permute.xlu0 %872
        %875 = vset.pattern.permute.xlu0 3
        %876 = vperm.xlu0 %875, %v692
        %v877 = vpop.permute.xlu0 %876
        %879 = vset.pattern.permute.xlu0 3
        %880 = vperm.xlu0 %879, %v693
        %v881 = vpop.permute.xlu0 %880
        %v884 = vperm.slane %v697, 0
        %v886 = vmul.f32 %v853, %v884
        %v887 = vmul.f32 %v857, %v884
        %v888 = vmul.f32 %v861, %v884
        %v889 = vmul.f32 %v865, %v884
        %v890 = vmul.f32 %v869, %v884
        %v891 = vmul.f32 %v873, %v884
        %v892 = vmul.f32 %v877, %v884
        %v893 = vmul.f32 %v881, %v884
        %v894 = vadd.f32 %v843, %v886
        %v895 = vadd.f32 %v844, %v887
        %v896 = vadd.f32 %v845, %v888
        %v897 = vadd.f32 %v846, %v889
        %v898 = vadd.f32 %v847, %v890
        %v899 = vadd.f32 %v848, %v891
        %v900 = vadd.f32 %v849, %v892
        %v901 = vadd.f32 %v850, %v893
        %v902 = vld [vmem:[%s4] sm:$0x1]
        %v904 = vperm.slane %v902, 0
        %v906 = vadd.f32 %v894, %v904
        %v907 = vadd.f32 %v895, %v904
        %v908 = vadd.f32 %v896, %v904
        %v909 = vadd.f32 %v897, %v904
        %v910 = vadd.f32 %v898, %v904
        %v911 = vadd.f32 %v899, %v904
        %v912 = vadd.f32 %v900, %v904
        %v913 = vadd.f32 %v901, %v904
        %v914 = vmax.f32 %v906, 0.0
        %v915 = vmax.f32 %v907, 0.0
        %v916 = vmax.f32 %v908, 0.0
        %v917 = vmax.f32 %v909, 0.0
        %v918 = vmax.f32 %v910, 0.0
        %v919 = vmax.f32 %v911, 0.0
        %v920 = vmax.f32 %v912, 0.0
        %v921 = vmax.f32 %v913, 0.0
        %922 = vst [vmem:[%s217] sm:$0xff] %v914
        %923 = vst [vmem:[%s217 + $0x8] sm:$0xff] %v915
        %924 = vst [vmem:[%s217 + $0x10] sm:$0xff] %v916
        %925 = vst [vmem:[%s217 + $0x18] sm:$0xff] %v917
        %926 = vst [vmem:[%s217 + $0x20] sm:$0xff] %v918
        %927 = vst [vmem:[%s217 + $0x28] sm:$0xff] %v919
        %928 = vst [vmem:[%s217 + $0x30] sm:$0xff] %v920
        %929 = vst [vmem:[%s217 + $0x38] sm:$0xff] %v921
        %s930 = sand.u32 %s137, 1
        %s931 = scalar_lea.sflag [#allocation3], %s930
        %s932 = sand.u32 %s137, 1
        %s933 = smul.addr %s932, 64
        %s934 = scalar_lea.vmem [#allocation2], %s933
        // Predicated region
        $region41: #{tpu_custom_call.1} parent=39 // pred_check
          %p935 = pneg %p147
        $region42: #{tpu_custom_call.1} parent=39 // pred_check_branch
          %937 = sbr.rel (%p935) target = $region44
        $region43: #{tpu_custom_call.1} parent=39 // pred_region
          %939 = vsyncadd %s931, 0
          %s940 = smul.addr %s19, 8
          %s941 = smul.addr %s940, 8
          %s942 = scalar_lea.hbm %s5, %s941
          %s943 = sshll.u32 %s934, 4
          %s944 = int_to_ptr.vmem [resolvable:$true] %s943
          %s945 = sshll.u32 %s942, 4
          %s946 = int_to_ptr.hbm [resolvable:$true] %s945
          %951 = dma.vmem_to_hbm [thread:$0]  %s944, 1024, %s946, %s931, 128, 128, 8
        $region44: #{tpu_custom_call.1} parent=39 // pred_fallthru
          _
      $region40: #{tpu_custom_call.1} parent=5 // pred_fallthru
        _
      %p952 = scmp.le.s32.totalorder 2, %s14
      // Predicated region
      $region45: #{tpu_custom_call.1} parent=5 // pred_check
        %p953 = pneg %p952
      $region46: #{tpu_custom_call.1} parent=5 // pred_check_branch
        %955 = sbr.rel (%p953) target = $region48
      $region47: #{tpu_custom_call.1} parent=5 // pred_region
        %s956 = ssub.s32 %s14, 2
        // Predicated region
        $region49: #{tpu_custom_call.1} parent=47 // pred_check
          %p957 = pneg %p153
        $region50: #{tpu_custom_call.1} parent=47 // pred_check_branch
          %959 = sbr.rel (%p957) target = $region52
        $region51: #{tpu_custom_call.1} parent=47 // pred_region
          %s960 = sand.u32 %s138, 1
          %s961 = scalar_lea.sflag [#allocation3], %s960
          %s962 = sand.u32 %s138, 1
          %s963 = smul.addr %s962, 64
          %s964 = scalar_lea.vmem [#allocation2], %s963
          %966 = dma.done %s961, 1024
        $region52: #{tpu_custom_call.1} parent=47 // pred_fallthru
          _
      $region48: #{tpu_custom_call.1} parent=5 // pred_fallthru
        _
    $region6: #{tpu_custom_call.1} parent=1 // loop_footer
      %s18 = sadd.s32 1, %s14
    $region7: #{tpu_custom_call.1} parent=1 // loop_footer_branch
      %13 = sbr.rel target = $region3
    $region8: #{tpu_custom_call.1} parent=1 // loop_exit
      _
    %967 = vsyncpa [#allocation3], 1
    %s968 = scalar_lea.sflag [#allocation3], 1
    %969 = vsyncpa %s968, 1

</llo_original>
